<compile_context>
chip_gen: v7x
topology: tpu7x:2x2x1
jax: 0.10.0
libtpu: 0.0.40
codegen_flags: <defaults>
</compile_context>

<pallas_src>
import functools

import jax
import jax.numpy as jnp
from jax.experimental import pallas as pl
from jax.experimental.pallas import tpu as pltpu


_SLACK_BYTES = 2 << 20  # Mosaic internal scratch / semaphores / misc headroom


# -----------------------------------------------------------------------------
# Generation-aware VMEM budget
# -----------------------------------------------------------------------------
def _vmem_budget_bytes():
    """Usable scoped-VMEM budget derived from the chip generation."""
    cap = None
    try:
        info = pltpu.get_tpu_info()
        for name in ("vmem_capacity_bytes", "vmem_bytes", "vmem_size_bytes"):
            cap = getattr(info, name, None)
            if cap:
                break
    except Exception:  # no TPU info available -> conservative default
        cap = None
    if not cap or cap <= 0:
        cap = 64 << 20  # assume the smallest (v7x-class) VMEM
    if cap >= (96 << 20):
        # v5e / v6e class parts: 128 MiB physical VMEM -> ~108 MiB usable.
        budget = cap - (20 << 20)
    else:
        # v7x class parts: 64 MiB per TensorCore -> keep ~10 MiB headroom.
        budget = min(cap - (10 << 20), 54 << 20)
    return int(max(budget, 16 << 20))


# -----------------------------------------------------------------------------
# Fused single-pass kernel: (bblk, C, HW) per grid step, 1 read + 1 write of x.
# -----------------------------------------------------------------------------
def _se_fused_kernel(x_ref, w1_ref, w2_ref, o_ref, *, inv_hw, bblk):
    # x_ref : (bblk, C, HW)  bblk whole images (contiguous in HBM)
    # w1_ref: (Cr, C)        fc1 weight, PyTorch (out, in) layout, bias=False
    # w2_ref: (C, Cr)        fc2 weight, PyTorch (out, in) layout, bias=False
    # o_ref : (bblk, C, HW)
    w1 = w1_ref[...]
    w2 = w2_ref[...]
    # Static unroll over the images in the block: each image's pool->fc->fc
    # chain is independent, so the LLO scheduler interleaves them; the matvec
    # FLOPs are negligible next to the block DMA (HBM-bound kernel).
    for bi in range(bblk):
        # squeeze: global average pool over the lane (spatial) axis -> (C, 1)
        y = jnp.sum(x_ref[bi].astype(jnp.float32), axis=-1, keepdims=True) * inv_hw
        # excitation: Linear -> ReLU -> Linear -> Sigmoid
        h = jnp.maximum(jnp.dot(w1, y, preferred_element_type=jnp.float32), 0.0)
        a = jax.nn.sigmoid(jnp.dot(w2, h, preferred_element_type=jnp.float32))
        # scale: re-read x from VMEM (keeps vreg live ranges small), broadcast
        # the (C,1) attention across lanes, store lane-dense along HW.
        # Multiply in the activation dtype (matches mixed-precision practice).
        o_ref[bi] = (x_ref[bi] * a.astype(x_ref.dtype)).astype(o_ref.dtype)


def _se_fused(x3, w_fc1, w_fc2, bblk, vmem_limit):
    b, c, hw = x3.shape
    cr = w_fc1.shape[0]
    x_bytes = x3.dtype.itemsize

    cost = pl.CostEstimate(
        flops=int(b * (2 * c * hw + 4 * c * cr)),
        transcendentals=int(b * c),
        bytes_accessed=int(2 * b * c * hw * x_bytes
                           + 2 * cr * c * w_fc1.dtype.itemsize),
    )

    return pl.pallas_call(
        functools.partial(_se_fused_kernel, inv_hw=1.0 / hw, bblk=bblk),
        out_shape=jax.ShapeDtypeStruct((b, c, hw), x3.dtype),
        grid_spec=pltpu.PrefetchScalarGridSpec(
            num_scalar_prefetch=0,
            grid=(b // bblk,),
            in_specs=[
                pl.BlockSpec((bblk, c, hw), lambda i: (i, 0, 0)),
                pl.BlockSpec((cr, c), lambda i: (0, 0)),
                pl.BlockSpec((c, cr), lambda i: (0, 0)),
            ],
            out_specs=pl.BlockSpec((bblk, c, hw), lambda i: (i, 0, 0)),
        ),
        compiler_params=pltpu.CompilerParams(
            dimension_semantics=("parallel",),
            vmem_limit_bytes=int(vmem_limit),
        ),
        cost_estimate=cost,
    )(x3, w_fc1, w_fc2)


# -----------------------------------------------------------------------------
# Channel-tiled two-pass fallback (only for feature maps too large to hold
# one whole image 4x in VMEM).  Tiles only the channel (sublane) axis, so
# block shapes are legal for any HW, stores stay lane-dense, and no masking
# or OOB handling is ever needed.
# -----------------------------------------------------------------------------
def _se_pool_kernel(x_ref, y_ref, *, inv_hw):
    # x_ref: (Ct, HW) channel tile of one image; y_ref: (Ct, 1) f32 means.
    y_ref[...] = (jnp.sum(x_ref[...].astype(jnp.float32), axis=-1, keepdims=True)
                  * inv_hw)


def _se_scale_kernel(x_ref, a_ref, o_ref):
    # x_ref: (Ct, HW), a_ref: (Ct, 1) f32 attention, o_ref: (Ct, HW)
    o_ref[...] = (x_ref[...] * a_ref[...].astype(x_ref.dtype)).astype(o_ref.dtype)


def _pick_c_tile(c, hw, itemsize, budget_bytes):
    """Largest multiple-of-8 divisor of C (or C itself) whose 4x double-buffered
    (c_tile, HW) block fits the VMEM budget."""
    fallback = None
    for t in range(c, 0, -1):
        if c % t:
            continue
        if 4 * t * hw * itemsize + _SLACK_BYTES > budget_bytes:
            continue
        if t % 8 == 0 or t == c:
            return t
        if fallback is None:
            fallback = t
    return fallback if fallback is not None else (8 if c % 8 == 0 else 1)


def _se_channel_tiled(x3, w_fc1, w_fc2, c_tile, vmem_limit):
    b, c, hw = x3.shape
    assert c % c_tile == 0, "c_tile must evenly divide C"
    n_ct = c // c_tile
    x_bytes = x3.dtype.itemsize

    # Both grid axes are independent -> both can shard across the two
    # TensorCores on v7x even when B == 1 (review: pass-A megacore use).
    cparams = pltpu.CompilerParams(
        dimension_semantics=("parallel", "parallel"),
        vmem_limit_bytes=int(vmem_limit),
    )

    # Pass A: global average pool per channel tile -> (B, C, 1) f32.
    y = pl.pallas_call(
        functools.partial(_se_pool_kernel, inv_hw=1.0 / hw),
        out_shape=jax.ShapeDtypeStruct((b, c, 1), jnp.float32),
        grid_spec=pltpu.PrefetchScalarGridSpec(
            num_scalar_prefetch=0,
            grid=(b, n_ct),
            in_specs=[pl.BlockSpec((pl.Squeezed(), c_tile, hw),
                                   lambda i, j: (i, j, 0))],
            out_specs=pl.BlockSpec((pl.Squeezed(), c_tile, 1),
                                   lambda i, j: (i, j, 0)),
        ),
        compiler_params=cparams,
        cost_estimate=pl.CostEstimate(
            flops=int(b * c * hw), transcendentals=0,
            bytes_accessed=int(b * c * hw * x_bytes + b * c * 4)),
    )(x3)

    # Excitation on the tiny (B, C) pooled matrix as batched XLA matmuls
    # (negligible next to the x traffic of the two passes).
    y2 = y.reshape(b, c)
    h = jnp.maximum(y2 @ w_fc1.astype(jnp.float32).T, 0.0)          # (B, Cr)
    att = jax.nn.sigmoid(h @ w_fc2.astype(jnp.float32).T)           # (B, C)
    att = att.reshape(b, c, 1).astype(jnp.float32)

    # Pass B: channel-wise scaling, tiled over channels (full-HW lane axis).
    return pl.pallas_call(
        _se_scale_kernel,
        out_shape=jax.ShapeDtypeStruct((b, c, hw), x3.dtype),
        grid_spec=pltpu.PrefetchScalarGridSpec(
            num_scalar_prefetch=0,
            grid=(b, n_ct),
            in_specs=[
                pl.BlockSpec((pl.Squeezed(), c_tile, hw), lambda i, j: (i, j, 0)),
                pl.BlockSpec((pl.Squeezed(), c_tile, 1), lambda i, j: (i, j, 0)),
            ],
            out_specs=pl.BlockSpec((pl.Squeezed(), c_tile, hw),
                                   lambda i, j: (i, j, 0)),
        ),
        compiler_params=cparams,
        cost_estimate=pl.CostEstimate(
            flops=int(b * c * hw), transcendentals=0,
            bytes_accessed=int(2 * b * c * hw * x_bytes + b * c * 4)),
    )(x3, att)


# -----------------------------------------------------------------------------
# Block-size selection for the fused path
# -----------------------------------------------------------------------------
def _pick_bblk(b, c, hw, x_itemsize, w_bytes_total, budget_bytes,
               target_block_bytes=4 << 20, max_bblk=8):
    """Largest divisor of B (<= max_bblk) whose fused (bblk, C, HW) block --
    double-buffered in and out, plus double-buffered weights -- fits the VMEM
    budget.  Stops growing once the block reaches ~target_block_bytes (larger
    blocks buy nothing: the kernel is HBM-bandwidth-bound).  Returns 0 if even
    a single image does not fit the fused path."""
    img_bytes = c * hw * x_itemsize
    best = 0
    for cand in range(1, min(b, max_bblk) + 1):
        if b % cand:
            continue
        need = 4 * cand * img_bytes + 4 * w_bytes_total + _SLACK_BYTES
        if need > budget_bytes:
            break
        best = cand
        if cand * img_bytes >= target_block_bytes:
            break
    return best


# -----------------------------------------------------------------------------
# Public wrapper
# -----------------------------------------------------------------------------
def se_layer(x_nchw, w_fc1, w_fc2, *, force_channel_tiled=False, c_tile=None):
    """SELayer forward (bias-free FC layers, matching the PyTorch module).

    x_nchw: (B, C, H, W)
    w_fc1 : (C // reduction, C)   nn.Linear weight (out, in), bias=False
    w_fc2 : (C, C // reduction)   nn.Linear weight (out, in), bias=False
    returns (B, C, H, W)
    """
    b, c, h, w = x_nchw.shape
    hw = h * w

    # NCHW is already contiguous as (B, C, H*W): this reshape is free
    # (no transpose, no extra HBM traffic).
    x3 = x_nchw.reshape(b, c, hw)

    budget = _vmem_budget_bytes()
    x_bytes = x_nchw.dtype.itemsize
    w_bytes_total = (w_fc1.size + w_fc2.size) * w_fc1.dtype.itemsize

    bblk = 0 if force_channel_tiled else _pick_bblk(
        b, c, hw, x_bytes, w_bytes_total, budget)

    if bblk >= 1:
        out3 = _se_fused(x3, w_fc1, w_fc2, bblk, vmem_limit=budget)
    else:
        if c_tile is None:
            c_tile = _pick_c_tile(c, hw, x_bytes, budget)
        out3 = _se_channel_tiled(x3, w_fc1, w_fc2, c_tile, vmem_limit=budget)

    return out3.reshape(b, c, h, w)


def se_layer_ref(x_nchw, w_fc1, w_fc2):
    """Pure-JAX reference matching PyTorch semantics exactly."""
    y = jnp.mean(x_nchw, axis=(2, 3))                      # (B, C)
    hdn = jnp.maximum(y @ w_fc1.T, 0.0)                    # (B, Cr)
    att = jax.nn.sigmoid(hdn @ w_fc2.T)                    # (B, C)
    return x_nchw * att[:, :, None, None]


if __name__ == "__main__":
    B, C, H, W = 2, 64, 16, 16      # HW = 256 -> lane-dense blocks
    reduction = 16
    CR = C // reduction

    key = jax.random.PRNGKey(0)
    kx, k1, k2 = jax.random.split(key, 3)

    x = jax.random.normal(kx, (B, C, H, W), dtype=jnp.float32)
    # matches nn.init.normal_(weight, 0, 0.01), bias=False
    w_fc1 = 0.01 * jax.random.normal(k1, (CR, C), dtype=jnp.float32)
    w_fc2 = 0.01 * jax.random.normal(k2, (C, CR), dtype=jnp.float32)

    ref = jax.block_until_ready(se_layer_ref(x, w_fc1, w_fc2))

    # Fused batched path (default): both images land in one (2, C, HW) block.
    out = jax.block_until_ready(se_layer(x, w_fc1, w_fc2))
    assert out.shape == (B, C, H, W)
    assert jnp.allclose(out, ref, atol=1e-5, rtol=1e-5), "fused path mismatch"

    # Channel-tiled two-pass fallback (only used for huge feature maps);
    # forced here so the path is exercised and verified.
    out_t = jax.block_until_ready(
        se_layer(x, w_fc1, w_fc2, force_channel_tiled=True, c_tile=16))
    assert jnp.allclose(out_t, ref, atol=1e-5, rtol=1e-5), "tiled path mismatch"

    print("KERNEL_OK")
</pallas_src>

<mosaic_0001>
module attributes {stable_mosaic.version = 11 : i64} {
  func.func @_se_fused_kernel(%arg0: i32, %arg1: memref<2x64x256xf32, #tpu.memory_space<vmem>>, %arg2: memref<4x64xf32, #tpu.memory_space<vmem>>, %arg3: memref<64x4xf32, #tpu.memory_space<vmem>>, %arg4: memref<2x64x256xf32, #tpu.memory_space<vmem>>) attributes {dimension_semantics = [#tpu.dimension_semantics<parallel>], iteration_bounds = array<i64: 1>, scalar_prefetch = 0 : i64, scratch_operands = 0 : i64, tpu.core_type = #tpu.core_type<tc>, window_params = [{transform_indices = @transform_0, window_bounds = array<i64: 2, 64, 256>}, {pipeline_mode = #tpu.pipeline_mode<synchronous>, transform_indices = @transform_1, window_bounds = array<i64: 4, 64>}, {pipeline_mode = #tpu.pipeline_mode<synchronous>, transform_indices = @transform_2, window_bounds = array<i64: 64, 4>}, {transform_indices = @transform_3, window_bounds = array<i64: 2, 64, 256>}]} {
    %c0 = arith.constant 0 : index
    %c0_0 = arith.constant 0 : index
    %0 = vector.load %arg2[%c0, %c0_0] : memref<4x64xf32, #tpu.memory_space<vmem>>, vector<4x64xf32>
    %c0_1 = arith.constant 0 : index
    %c0_2 = arith.constant 0 : index
    %1 = vector.load %arg3[%c0_1, %c0_2] : memref<64x4xf32, #tpu.memory_space<vmem>>, vector<64x4xf32>
    %c0_3 = arith.constant 0 : index
    %c0_4 = arith.constant 0 : index
    %c0_5 = arith.constant 0 : index
    %2 = vector.load %arg1[%c0_3, %c0_4, %c0_5] : memref<2x64x256xf32, #tpu.memory_space<vmem>>, vector<1x64x256xf32>
    %3 = vector.shape_cast %2 : vector<1x64x256xf32> to vector<64x256xf32>
    %cst = arith.constant dense<0.000000e+00> : vector<64xf32>
    %4 = vector.multi_reduction <add>, %3, %cst [1] : vector<64x256xf32> to vector<64xf32>
    %5 = vector.shape_cast %4 : vector<64xf32> to vector<64x1xf32>
    %cst_6 = arith.constant 3.906250e-03 : f32
    %6 = vector.broadcast %cst_6 : f32 to vector<64x1xf32>
    %7 = arith.mulf %5, %6 : vector<64x1xf32>
    %cst_7 = arith.constant dense<0.000000e+00> : vector<4x1xf32>
    %8 = tpu.matmul %0, %7, %cst_7 {dimension_numbers = #tpu.dot_dimension_numbers<[1], [0], [0], [1], [0, 0, 1, 1], [], []>} : vector<4x64xf32>, vector<64x1xf32>, vector<4x1xf32> -> vector<4x1xf32>
    %cst_8 = arith.constant 0.000000e+00 : f32
    %9 = vector.broadcast %cst_8 : f32 to vector<4x1xf32>
    %10 = arith.maximumf %8, %9 : vector<4x1xf32>
    %cst_9 = arith.constant dense<0.000000e+00> : vector<64x1xf32>
    %11 = tpu.matmul %1, %10, %cst_9 {dimension_numbers = #tpu.dot_dimension_numbers<[1], [0], [0], [1], [0, 0, 1, 1], [], []>} : vector<64x4xf32>, vector<4x1xf32>, vector<64x1xf32> -> vector<64x1xf32>
    %12 = arith.negf %11 : vector<64x1xf32>
    %13 = math.exp %12 : vector<64x1xf32>
    %cst_10 = arith.constant 1.000000e+00 : f32
    %14 = vector.broadcast %cst_10 : f32 to vector<64x1xf32>
    %15 = arith.addf %14, %13 : vector<64x1xf32>
    %16 = arith.divf %14, %15 : vector<64x1xf32>
    %c0_11 = arith.constant 0 : index
    %c0_12 = arith.constant 0 : index
    %c0_13 = arith.constant 0 : index
    %17 = vector.load %arg1[%c0_11, %c0_12, %c0_13] : memref<2x64x256xf32, #tpu.memory_space<vmem>>, vector<1x64x256xf32>
    %18 = vector.shape_cast %17 : vector<1x64x256xf32> to vector<64x256xf32>
    %19 = vector.broadcast %16 : vector<64x1xf32> to vector<64x256xf32>
    %20 = arith.mulf %18, %19 : vector<64x256xf32>
    %c0_14 = arith.constant 0 : index
    %c0_15 = arith.constant 0 : index
    %c0_16 = arith.constant 0 : index
    %21 = vector.load %arg4[%c0_14, %c0_15, %c0_16] : memref<2x64x256xf32, #tpu.memory_space<vmem>>, vector<1x64x256xf32>
    %22 = vector.shape_cast %21 : vector<1x64x256xf32> to vector<64x256xf32>
    %23 = vector.shape_cast %20 : vector<64x256xf32> to vector<1x64x256xf32>
    tpu.vector_store %arg4[%c0_14, %c0_15, %c0_16], %23 {strides = array<i32>} : memref<2x64x256xf32, #tpu.memory_space<vmem>>, vector<1x64x256xf32>,
    %c1 = arith.constant 1 : index
    %c0_17 = arith.constant 0 : index
    %c0_18 = arith.constant 0 : index
    %24 = vector.load %arg1[%c1, %c0_17, %c0_18] : memref<2x64x256xf32, #tpu.memory_space<vmem>>, vector<1x64x256xf32>
    %25 = vector.shape_cast %24 : vector<1x64x256xf32> to vector<64x256xf32>
    %cst_19 = arith.constant dense<0.000000e+00> : vector<64xf32>
    %26 = vector.multi_reduction <add>, %25, %cst_19 [1] : vector<64x256xf32> to vector<64xf32>
    %27 = vector.shape_cast %26 : vector<64xf32> to vector<64x1xf32>
    %cst_20 = arith.constant 3.906250e-03 : f32
    %28 = vector.broadcast %cst_20 : f32 to vector<64x1xf32>
    %29 = arith.mulf %27, %28 : vector<64x1xf32>
    %cst_21 = arith.constant dense<0.000000e+00> : vector<4x1xf32>
    %30 = tpu.matmul %0, %29, %cst_21 {dimension_numbers = #tpu.dot_dimension_numbers<[1], [0], [0], [1], [0, 0, 1, 1], [], []>} : vector<4x64xf32>, vector<64x1xf32>, vector<4x1xf32> -> vector<4x1xf32>
    %cst_22 = arith.constant 0.000000e+00 : f32
    %31 = vector.broadcast %cst_22 : f32 to vector<4x1xf32>
    %32 = arith.maximumf %30, %31 : vector<4x1xf32>
    %cst_23 = arith.constant dense<0.000000e+00> : vector<64x1xf32>
    %33 = tpu.matmul %1, %32, %cst_23 {dimension_numbers = #tpu.dot_dimension_numbers<[1], [0], [0], [1], [0, 0, 1, 1], [], []>} : vector<64x4xf32>, vector<4x1xf32>, vector<64x1xf32> -> vector<64x1xf32>
    %34 = arith.negf %33 : vector<64x1xf32>
    %35 = math.exp %34 : vector<64x1xf32>
    %cst_24 = arith.constant 1.000000e+00 : f32
    %36 = vector.broadcast %cst_24 : f32 to vector<64x1xf32>
    %37 = arith.addf %36, %35 : vector<64x1xf32>
    %38 = arith.divf %36, %37 : vector<64x1xf32>
    %c1_25 = arith.constant 1 : index
    %c0_26 = arith.constant 0 : index
    %c0_27 = arith.constant 0 : index
    %39 = vector.load %arg1[%c1_25, %c0_26, %c0_27] : memref<2x64x256xf32, #tpu.memory_space<vmem>>, vector<1x64x256xf32>
    %40 = vector.shape_cast %39 : vector<1x64x256xf32> to vector<64x256xf32>
    %41 = vector.broadcast %38 : vector<64x1xf32> to vector<64x256xf32>
    %42 = arith.mulf %40, %41 : vector<64x256xf32>
    %c1_28 = arith.constant 1 : index
    %c0_29 = arith.constant 0 : index
    %c0_30 = arith.constant 0 : index
    %43 = vector.load %arg4[%c1_28, %c0_29, %c0_30] : memref<2x64x256xf32, #tpu.memory_space<vmem>>, vector<1x64x256xf32>
    %44 = vector.shape_cast %43 : vector<1x64x256xf32> to vector<64x256xf32>
    %45 = vector.shape_cast %42 : vector<64x256xf32> to vector<1x64x256xf32>
    tpu.vector_store %arg4[%c1_28, %c0_29, %c0_30], %45 {strides = array<i32>} : memref<2x64x256xf32, #tpu.memory_space<vmem>>, vector<1x64x256xf32>,
    return
  }
  func.func @transform_0(%arg0: i32) -> (i32, i32, i32) {
    %c0_i32 = arith.constant 0 : i32
    %c0_i32_0 = arith.constant 0 : i32
    %c0_i32_1 = arith.constant 0 : i32
    return %arg0, %c0_i32, %c0_i32_0 : i32, i32, i32
  }
  func.func @transform_1(%arg0: i32) -> (i32, i32) {
    %c0_i32 = arith.constant 0 : i32
    %c0_i32_0 = arith.constant 0 : i32
    %c0_i32_1 = arith.constant 0 : i32
    return %c0_i32, %c0_i32_0 : i32, i32
  }
  func.func @transform_2(%arg0: i32) -> (i32, i32) {
    %c0_i32 = arith.constant 0 : i32
    %c0_i32_0 = arith.constant 0 : i32
    %c0_i32_1 = arith.constant 0 : i32
    return %c0_i32, %c0_i32_0 : i32, i32
  }
  func.func @transform_3(%arg0: i32) -> (i32, i32, i32) {
    %c0_i32 = arith.constant 0 : i32
    %c0_i32_0 = arith.constant 0 : i32
    %c0_i32_1 = arith.constant 0 : i32
    return %arg0, %c0_i32, %c0_i32_0 : i32, i32, i32
  }
}

</mosaic_0001>

<llo_original>
// kernel: tpu_custom_call.1
$region0: #{tpu_custom_call.1}
  #allocation0 [shape = 'u32[]', space=smem, size = 0x4, offset = 0x4, fixed_abs, tag = 'smem constant byte address 0x4 - core index']
  #allocation1 [shape = 'u32[144,128]{1,0:T(1,128)}', space=vmem, size = 0x12000, scoped, tag = 'internal scratch']
  %s0 = inlined_call_operand.hbm [shape: f32[2,64,256], index: 0, kind: input, shape index: {}]
  %s1 = inlined_call_operand.vmem [shape: f32[4,64], index: 1, kind: input, shape index: {}]
  %s2 = inlined_call_operand.vmem [shape: f32[64,4], index: 2, kind: input, shape index: {}]
  %s3 = inlined_call_operand.hbm [shape: f32[2,64,256], index: 3, kind: output, shape index: {}]
  %s4 = sld [smem:[#allocation0]]
  $region26: #{tpu_custom_call.1} parent=0
    _
  %s6 = ssub.s32 1, %s4
  %s7 = scalar_select 0, %s6, %s4
  $region1: #{tpu_custom_call.1} parent=0
    #allocation2 [shape = 'u8[131072]{0}', space=vmem, size = 0x20000, scoped, tag = 'input window, operand 0, single buffered']
    #allocation3 [shape = 's32[1]{0}', space=sflag, size = 0x4, scoped, tag = 'scoped memory for tpu_custom_call.1']
    #allocation4 [shape = 's32[1]{0}', space=sflag, size = 0x4, scoped, tag = 'scoped memory for tpu_custom_call.1']
    #allocation5 [shape = 'u8[131072]{0}', space=vmem, size = 0x20000, scoped, tag = 'output window, operand 0, single buffered']
    %8 = vsyncpa [#allocation3], 0
    %9 = vsyncpa [#allocation4], 0
    // Predicated region
    $region2: #{tpu_custom_call.1} parent=1 // pred_check
      _
    $region3: #{tpu_custom_call.1} parent=1 // pred_check_branch
      %11 = sbr.rel (0) target = $region5
    $region4: #{tpu_custom_call.1} parent=1 // pred_region
      %s13 = ssub.s32 4096, 4096
      %14 = vsyncadd [#allocation3], %s13
      %s15 = sshll.u32 [#allocation2], 4
      %s16 = int_to_ptr.vmem [resolvable:$true] %s15
      %21 = dma.hbm_to_vmem [thread:$0]  %s0, 4096, %s16, [#allocation3], 256, 256, 16
    $region5: #{tpu_custom_call.1} parent=1 // pred_fallthru
      _
    // Predicated region
    $region6: #{tpu_custom_call.1} parent=1 // pred_check
      _
    $region7: #{tpu_custom_call.1} parent=1 // pred_check_branch
      %23 = sbr.rel (0) target = $region9
    $region8: #{tpu_custom_call.1} parent=1 // pred_region
      _
    $region9: #{tpu_custom_call.1} parent=1 // pred_fallthru
      _
    // Predicated region
    $region10: #{tpu_custom_call.1} parent=1 // pred_check
      _
    $region11: #{tpu_custom_call.1} parent=1 // pred_check_branch
      %25 = sbr.rel (0) target = $region13
    $region12: #{tpu_custom_call.1} parent=1 // pred_region
      _
    $region13: #{tpu_custom_call.1} parent=1 // pred_fallthru
      _
    // Predicated region
    $region14: #{tpu_custom_call.1} parent=1 // pred_check
      _
    $region15: #{tpu_custom_call.1} parent=1 // pred_check_branch
      %27 = sbr.rel (0) target = $region17
    $region16: #{tpu_custom_call.1} parent=1 // pred_region
      %28 = dma.done [#allocation3], 4096
    $region17: #{tpu_custom_call.1} parent=1 // pred_fallthru
      _
    %v29 = vld [vmem:[%s1] sm:$0xf]
    %v30 = vld [vmem:[%s2] sm:$0xff]
    %v31 = vld [vmem:[%s2 + $0x8] sm:$0xff]
    %v32 = vld [vmem:[%s2 + $0x10] sm:$0xff]
    %v33 = vld [vmem:[%s2 + $0x18] sm:$0xff]
    %v34 = vld [vmem:[%s2 + $0x20] sm:$0xff]
    %v35 = vld [vmem:[%s2 + $0x28] sm:$0xff]
    %v36 = vld [vmem:[%s2 + $0x30] sm:$0xff]
    %v37 = vld [vmem:[%s2 + $0x38] sm:$0xff]
    %v38 = vld [vmem:[#allocation2] sm:$0xff]
    %v39 = vld [vmem:[#allocation2 + $0x8] sm:$0xff]
    %v40 = vld [vmem:[#allocation2 + $0x10] sm:$0xff]
    %v41 = vld [vmem:[#allocation2 + $0x18] sm:$0xff]
    %v42 = vld [vmem:[#allocation2 + $0x20] sm:$0xff]
    %v43 = vld [vmem:[#allocation2 + $0x28] sm:$0xff]
    %v44 = vld [vmem:[#allocation2 + $0x30] sm:$0xff]
    %v45 = vld [vmem:[#allocation2 + $0x38] sm:$0xff]
    %v46 = vld [vmem:[#allocation2 + $0x40] sm:$0xff]
    %v47 = vld [vmem:[#allocation2 + $0x48] sm:$0xff]
    %v48 = vld [vmem:[#allocation2 + $0x50] sm:$0xff]
    %v49 = vld [vmem:[#allocation2 + $0x58] sm:$0xff]
    %v50 = vld [vmem:[#allocation2 + $0x60] sm:$0xff]
    %v51 = vld [vmem:[#allocation2 + $0x68] sm:$0xff]
    %v52 = vld [vmem:[#allocation2 + $0x70] sm:$0xff]
    %v53 = vld [vmem:[#allocation2 + $0x78] sm:$0xff]
    %v54 = vadd.f32 %v38, %v39
    %55 = vadd.xlane.f32.xlu0 %v54
    %v56 = vpop.xlane.xlu0 %55
    %v57 = vadd.f32 %v40, %v41
    %58 = vadd.xlane.f32.xlu0 %v57
    %v59 = vpop.xlane.xlu0 %58
    %v60 = vadd.f32 %v42, %v43
    %61 = vadd.xlane.f32.xlu0 %v60
    %v62 = vpop.xlane.xlu0 %61
    %v63 = vadd.f32 %v44, %v45
    %64 = vadd.xlane.f32.xlu0 %v63
    %v65 = vpop.xlane.xlu0 %64
    %v66 = vadd.f32 %v46, %v47
    %67 = vadd.xlane.f32.xlu0 %v66
    %v68 = vpop.xlane.xlu0 %67
    %v69 = vadd.f32 %v48, %v49
    %70 = vadd.xlane.f32.xlu0 %v69
    %v71 = vpop.xlane.xlu0 %70
    %v72 = vadd.f32 %v50, %v51
    %73 = vadd.xlane.f32.xlu0 %v72
    %v74 = vpop.xlane.xlu0 %73
    %v75 = vadd.f32 %v52, %v53
    %76 = vadd.xlane.f32.xlu0 %v75
    %v77 = vpop.xlane.xlu0 %76
    %v78 = vmul.f32 %v56, 0.00390625
    %v79 = vmul.f32 %v59, 0.00390625
    %v80 = vmul.f32 %v62, 0.00390625
    %v81 = vmul.f32 %v65, 0.00390625
    %v82 = vmul.f32 %v68, 0.00390625
    %v83 = vmul.f32 %v71, 0.00390625
    %v84 = vmul.f32 %v74, 0.00390625
    %v85 = vmul.f32 %v77, 0.00390625
    %vm86 = vcmask 523264
    %v88 = vsel %vm86, %v29, 0
    %90 = vmatprep.subr.mxu0 0.0
    %91 = vmatpush1.msra.mxu0 %v78
    %92 = vmatprep.subr.mxu0 0.0
    %93 = vmatpush1.msra.mxu0 %v79
    %94 = vmatprep.subr.mxu0 0.0
    %95 = vmatpush1.msra.mxu0 %v80
    %96 = vmatprep.subr.mxu0 0.0
    %97 = vmatpush1.msra.mxu0 %v81
    %98 = vmatprep.subr.mxu0 0.0
    %99 = vmatpush1.msra.mxu0 %v82
    %100 = vmatprep.subr.mxu0 0.0
    %101 = vmatpush1.msra.mxu0 %v83
    %102 = vmatprep.subr.mxu0 0.0
    %103 = vmatpush1.msra.mxu0 %v84
    %104 = vmatprep.subr.mxu0 0.0
    %105 = vmatpush1.msra.mxu0 %v85
    %106 = vmatprep.subr.mxu0 0.0
    %107 = vmatpush1.msra.mxu0 0.0
    %108 = vmatprep.subr.mxu0 0.0
    %109 = vmatpush1.msra.mxu0 0.0
    %110 = vmatprep.subr.mxu0 0.0
    %111 = vmatpush1.msra.mxu0 0.0
    %112 = vmatprep.subr.mxu0 0.0
    %113 = vmatpush1.msra.mxu0 0.0
    %114 = vmatprep.subr.mxu0 0.0
    %115 = vmatpush1.msra.mxu0 0.0
    %116 = vmatprep.subr.mxu0 0.0
    %117 = vmatpush1.msra.mxu0 0.0
    %118 = vmatprep.subr.mxu0 0.0
    %119 = vmatpush1.msra.mxu0 0.0
    %120 = vmatprep.subr.mxu0 0.0
    %121 = vmatpush1.msra.mxu0 0.0
    %122 = vmatprep.subr.mxu0 0.0
    %123 = vmatpush1.msra.mxu0 0.0
    %124 = vmatprep.subr.mxu0 0.0
    %125 = vmatpush1.msra.mxu0 0.0
    %126 = vmatprep.subr.mxu0 0.0
    %127 = vmatpush1.msra.mxu0 0.0
    %128 = vmatprep.subr.mxu0 0.0
    %129 = vmatpush1.msra.mxu0 0.0
    %130 = vmatprep.subr.mxu0 0.0
    %131 = vmatpush1.msra.mxu0 0.0
    %132 = vmatprep.subr.mxu0 0.0
    %133 = vmatpush1.msra.mxu0 0.0
    %134 = vmatprep.subr.mxu0 0.0
    %135 = vmatpush1.msra.mxu0 0.0
    %136 = vmatprep.subr.mxu0 0.0
    %137 = vmatpush1.msra.mxu0 0.0
    %138 = vmatprep.subr.mxu0 0.0
    %139 = vmatpush1.msra.mxu0 0.0
    %140 = vmatprep.subr.mxu0 0.0
    %141 = vmatpush1.msra.mxu0 0.0
    %142 = vmatprep.subr.mxu0 0.0
    %143 = vmatpush1.msra.mxu0 0.0
    %144 = vmatprep.subr.mxu0 0.0
    %145 = vmatpush1.msra.mxu0 0.0
    %146 = vmatprep.subr.mxu0 0.0
    %147 = vmatpush1.msra.mxu0 0.0
    %148 = vmatprep.subr.mxu0 0.0
    %149 = vmatpush1.msra.mxu0 0.0
    %150 = vmatprep.subr.mxu0 0.0
    %151 = vmatpush1.msra.mxu0 0.0
    %152 = vmatprep.subr.mxu0 0.0
    %153 = vmatpush1.msra.mxu0 0.0
    %154 = vmatprep.mubr.f32.mxu0 0.0
    %155 = vmatmul.mubr.f32.gmra.mrb[0].mxu0 %v88
    %v156 = vpop.f32.mrb[0].mxu0
    %v157 = vadd.f32 0.0, %v156
    %v158 = vpop.f32.mrb[0].mxu0
    %159 = vdwg.mxu0
    %v160 = vmax.f32 %v157, 0.0
    %vm161 = vcmask 31744
    %v163 = vsel %vm161, %v30, 0
    %v166 = vsel %vm161, %v31, 0
    %v169 = vsel %vm161, %v32, 0
    %v172 = vsel %vm161, %v33, 0
    %v175 = vsel %vm161, %v34, 0
    %v178 = vsel %vm161, %v35, 0
    %v181 = vsel %vm161, %v36, 0
    %v184 = vsel %vm161, %v37, 0
    %vm186 = vcmask 1043456
    %v188 = vsel %vm186, %v160, 0
    %190 = vmatprep.subr.mxu0 0.0
    %191 = vmatpush1.msra.mxu0 %v188
    %192 = vmatprep.subr.mxu0 0.0
    %193 = vmatpush1.msra.mxu0 0.0
    %194 = vmatprep.subr.mxu0 0.0
    %195 = vmatpush1.msra.mxu0 0.0
    %196 = vmatprep.subr.mxu0 0.0
    %197 = vmatpush1.msra.mxu0 0.0
    %198 = vmatprep.subr.mxu0 0.0
    %199 = vmatpush1.msra.mxu0 0.0
    %200 = vmatprep.subr.mxu0 0.0
    %201 = vmatpush1.msra.mxu0 0.0
    %202 = vmatprep.subr.mxu0 0.0
    %203 = vmatpush1.msra.mxu0 0.0
    %204 = vmatprep.subr.mxu0 0.0
    %205 = vmatpush1.msra.mxu0 0.0
    %206 = vmatprep.subr.mxu0 0.0
    %207 = vmatpush1.msra.mxu0 0.0
    %208 = vmatprep.subr.mxu0 0.0
    %209 = vmatpush1.msra.mxu0 0.0
    %210 = vmatprep.subr.mxu0 0.0
    %211 = vmatpush1.msra.mxu0 0.0
    %212 = vmatprep.subr.mxu0 0.0
    %213 = vmatpush1.msra.mxu0 0.0
    %214 = vmatprep.subr.mxu0 0.0
    %215 = vmatpush1.msra.mxu0 0.0
    %216 = vmatprep.subr.mxu0 0.0
    %217 = vmatpush1.msra.mxu0 0.0
    %218 = vmatprep.subr.mxu0 0.0
    %219 = vmatpush1.msra.mxu0 0.0
    %220 = vmatprep.subr.mxu0 0.0
    %221 = vmatpush1.msra.mxu0 0.0
    %222 = vmatprep.subr.mxu0 0.0
    %223 = vmatpush1.msra.mxu0 0.0
    %224 = vmatprep.subr.mxu0 0.0
    %225 = vmatpush1.msra.mxu0 0.0
    %226 = vmatprep.subr.mxu0 0.0
    %227 = vmatpush1.msra.mxu0 0.0
    %228 = vmatprep.subr.mxu0 0.0
    %229 = vmatpush1.msra.mxu0 0.0
    %230 = vmatprep.subr.mxu0 0.0
    %231 = vmatpush1.msra.mxu0 0.0
    %232 = vmatprep.subr.mxu0 0.0
    %233 = vmatpush1.msra.mxu0 0.0
    %234 = vmatprep.subr.mxu0 0.0
    %235 = vmatpush1.msra.mxu0 0.0
    %236 = vmatprep.subr.mxu0 0.0
    %237 = vmatpush1.msra.mxu0 0.0
    %238 = vmatprep.subr.mxu0 0.0
    %239 = vmatpush1.msra.mxu0 0.0
    %240 = vmatprep.subr.mxu0 0.0
    %241 = vmatpush1.msra.mxu0 0.0
    %242 = vmatprep.subr.mxu0 0.0
    %243 = vmatpush1.msra.mxu0 0.0
    %244 = vmatprep.subr.mxu0 0.0
    %245 = vmatpush1.msra.mxu0 0.0
    %246 = vmatprep.subr.mxu0 0.0
    %247 = vmatpush1.msra.mxu0 0.0
    %248 = vmatprep.subr.mxu0 0.0
    %249 = vmatpush1.msra.mxu0 0.0
    %250 = vmatprep.subr.mxu0 0.0
    %251 = vmatpush1.msra.mxu0 0.0
    %252 = vmatprep.subr.mxu0 0.0
    %253 = vmatpush1.msra.mxu0 0.0
    %254 = vmatprep.mubr.f32.mxu0 0.0
    %255 = vmatmul.mubr.f32.gmra.mrb[0].mxu0 %v163
    %v256 = vpop.f32.mrb[0].mxu0
    %v257 = vadd.f32 0.0, %v256
    %v258 = vpop.f32.mrb[0].mxu0
    %259 = vmatprep.mubr.f32.mxu0 0.0
    %260 = vmatmul.mubr.f32.gmra.mrb[0].mxu0 %v166
    %v261 = vpop.f32.mrb[0].mxu0
    %v262 = vadd.f32 0.0, %v261
    %v263 = vpop.f32.mrb[0].mxu0
    %264 = vmatprep.mubr.f32.mxu0 0.0
    %265 = vmatmul.mubr.f32.gmra.mrb[0].mxu0 %v169
    %v266 = vpop.f32.mrb[0].mxu0
    %v267 = vadd.f32 0.0, %v266
    %v268 = vpop.f32.mrb[0].mxu0
    %269 = vmatprep.mubr.f32.mxu0 0.0
    %270 = vmatmul.mubr.f32.gmra.mrb[0].mxu0 %v172
    %v271 = vpop.f32.mrb[0].mxu0
    %v272 = vadd.f32 0.0, %v271
    %v273 = vpop.f32.mrb[0].mxu0
    %274 = vmatprep.mubr.f32.mxu0 0.0
    %275 = vmatmul.mubr.f32.gmra.mrb[0].mxu0 %v175
    %v276 = vpop.f32.mrb[0].mxu0
    %v277 = vadd.f32 0.0, %v276
    %v278 = vpop.f32.mrb[0].mxu0
    %279 = vmatprep.mubr.f32.mxu0 0.0
    %280 = vmatmul.mubr.f32.gmra.mrb[0].mxu0 %v178
    %v281 = vpop.f32.mrb[0].mxu0
    %v282 = vadd.f32 0.0, %v281
    %v283 = vpop.f32.mrb[0].mxu0
    %284 = vmatprep.mubr.f32.mxu0 0.0
    %285 = vmatmul.mubr.f32.gmra.mrb[0].mxu0 %v181
    %v286 = vpop.f32.mrb[0].mxu0
    %v287 = vadd.f32 0.0, %v286
    %v288 = vpop.f32.mrb[0].mxu0
    %289 = vmatprep.mubr.f32.mxu0 0.0
    %290 = vmatmul.mubr.f32.gmra.mrb[0].mxu0 %v184
    %v291 = vpop.f32.mrb[0].mxu0
    %v292 = vadd.f32 0.0, %v291
    %v293 = vpop.f32.mrb[0].mxu0
    %294 = vdwg.mxu0
    %v295 = vxor.u32 %v257, 2147483648
    %v296 = vxor.u32 %v262, 2147483648
    %v297 = vxor.u32 %v267, 2147483648
    %v298 = vxor.u32 %v272, 2147483648
    %v299 = vxor.u32 %v277, 2147483648
    %v300 = vxor.u32 %v282, 2147483648
    %v301 = vxor.u32 %v287, 2147483648
    %v302 = vxor.u32 %v292, 2147483648
    %v303 = vmul.f32 %v295, 1.442695
    %v304 = vpow.pop %v303
    %v305 = vmul.f32 %v296, 1.442695
    %v306 = vpow.pop %v305
    %v307 = vmul.f32 %v297, 1.442695
    %v308 = vpow.pop %v307
    %v309 = vmul.f32 %v298, 1.442695
    %v310 = vpow.pop %v309
    %v311 = vmul.f32 %v299, 1.442695
    %v312 = vpow.pop %v311
    %v313 = vmul.f32 %v300, 1.442695
    %v314 = vpow.pop %v313
    %v315 = vmul.f32 %v301, 1.442695
    %v316 = vpow.pop %v315
    %v317 = vmul.f32 %v302, 1.442695
    %v318 = vpow.pop %v317
    %v319 = vadd.f32 %v304, 1.0
    %v320 = vadd.f32 %v306, 1.0
    %v321 = vadd.f32 %v308, 1.0
    %v322 = vadd.f32 %v310, 1.0
    %v323 = vadd.f32 %v312, 1.0
    %v324 = vadd.f32 %v314, 1.0
    %v325 = vadd.f32 %v316, 1.0
    %v326 = vadd.f32 %v318, 1.0
    %v327 = vrcp.pop %v319
    %v328 = vmul.f32 1.0, %v327
    %v329 = vrcp.pop %v320
    %v330 = vmul.f32 1.0, %v329
    %v331 = vrcp.pop %v321
    %v332 = vmul.f32 1.0, %v331
    %v333 = vrcp.pop %v322
    %v334 = vmul.f32 1.0, %v333
    %v335 = vrcp.pop %v323
    %v336 = vmul.f32 1.0, %v335
    %v337 = vrcp.pop %v324
    %v338 = vmul.f32 1.0, %v337
    %v339 = vrcp.pop %v325
    %v340 = vmul.f32 1.0, %v339
    %v341 = vrcp.pop %v326
    %v342 = vmul.f32 1.0, %v341
    %344 = vset.pattern.permute.xlu0 0
    %345 = vperm.xlu0 %344, %v328
    %v346 = vpop.permute.xlu0 %345
    %349 = vset.pattern.permute.xlu0 0
    %350 = vperm.xlu0 %349, %v330
    %v351 = vpop.permute.xlu0 %350
    %354 = vset.pattern.permute.xlu0 0
    %355 = vperm.xlu0 %354, %v332
    %v356 = vpop.permute.xlu0 %355
    %359 = vset.pattern.permute.xlu0 0
    %360 = vperm.xlu0 %359, %v334
    %v361 = vpop.permute.xlu0 %360
    %364 = vset.pattern.permute.xlu0 0
    %365 = vperm.xlu0 %364, %v336
    %v366 = vpop.permute.xlu0 %365
    %369 = vset.pattern.permute.xlu0 0
    %370 = vperm.xlu0 %369, %v338
    %v371 = vpop.permute.xlu0 %370
    %374 = vset.pattern.permute.xlu0 0
    %375 = vperm.xlu0 %374, %v340
    %v376 = vpop.permute.xlu0 %375
    %379 = vset.pattern.permute.xlu0 0
    %380 = vperm.xlu0 %379, %v342
    %v381 = vpop.permute.xlu0 %380
    %v383 = vmul.f32 %v38, %v346
    %v384 = vmul.f32 %v39, %v346
    %v385 = vmul.f32 %v40, %v351
    %v386 = vmul.f32 %v41, %v351
    %v387 = vmul.f32 %v42, %v356
    %v388 = vmul.f32 %v43, %v356
    %v389 = vmul.f32 %v44, %v361
    %v390 = vmul.f32 %v45, %v361
    %v391 = vmul.f32 %v46, %v366
    %v392 = vmul.f32 %v47, %v366
    %v393 = vmul.f32 %v48, %v371
    %v394 = vmul.f32 %v49, %v371
    %v395 = vmul.f32 %v50, %v376
    %v396 = vmul.f32 %v51, %v376
    %v397 = vmul.f32 %v52, %v381
    %v398 = vmul.f32 %v53, %v381
    %399 = vst [vmem:[#allocation5] sm:$0xff] %v383
    %400 = vst [vmem:[#allocation5 + $0x8] sm:$0xff] %v384
    %401 = vst [vmem:[#allocation5 + $0x10] sm:$0xff] %v385
    %402 = vst [vmem:[#allocation5 + $0x18] sm:$0xff] %v386
    %403 = vst [vmem:[#allocation5 + $0x20] sm:$0xff] %v387
    %404 = vst [vmem:[#allocation5 + $0x28] sm:$0xff] %v388
    %405 = vst [vmem:[#allocation5 + $0x30] sm:$0xff] %v389
    %406 = vst [vmem:[#allocation5 + $0x38] sm:$0xff] %v390
    %407 = vst [vmem:[#allocation5 + $0x40] sm:$0xff] %v391
    %408 = vst [vmem:[#allocation5 + $0x48] sm:$0xff] %v392
    %409 = vst [vmem:[#allocation5 + $0x50] sm:$0xff] %v393
    %410 = vst [vmem:[#allocation5 + $0x58] sm:$0xff] %v394
    %411 = vst [vmem:[#allocation5 + $0x60] sm:$0xff] %v395
    %412 = vst [vmem:[#allocation5 + $0x68] sm:$0xff] %v396
    %413 = vst [vmem:[#allocation5 + $0x70] sm:$0xff] %v397
    %414 = vst [vmem:[#allocation5 + $0x78] sm:$0xff] %v398
    %s415 = scalar_lea.vmem [#allocation2], 128
    %v416 = vld [vmem:[%s415] sm:$0xff]
    %v417 = vld [vmem:[%s415 + $0x8] sm:$0xff]
    %v418 = vld [vmem:[%s415 + $0x10] sm:$0xff]
    %v419 = vld [vmem:[%s415 + $0x18] sm:$0xff]
    %v420 = vld [vmem:[%s415 + $0x20] sm:$0xff]
    %v421 = vld [vmem:[%s415 + $0x28] sm:$0xff]
    %v422 = vld [vmem:[%s415 + $0x30] sm:$0xff]
    %v423 = vld [vmem:[%s415 + $0x38] sm:$0xff]
    %v424 = vld [vmem:[%s415 + $0x40] sm:$0xff]
    %v425 = vld [vmem:[%s415 + $0x48] sm:$0xff]
    %v426 = vld [vmem:[%s415 + $0x50] sm:$0xff]
    %v427 = vld [vmem:[%s415 + $0x58] sm:$0xff]
    %v428 = vld [vmem:[%s415 + $0x60] sm:$0xff]
    %v429 = vld [vmem:[%s415 + $0x68] sm:$0xff]
    %v430 = vld [vmem:[%s415 + $0x70] sm:$0xff]
    %v431 = vld [vmem:[%s415 + $0x78] sm:$0xff]
    %v432 = vadd.f32 %v416, %v417
    %433 = vadd.xlane.f32.xlu0 %v432
    %v434 = vpop.xlane.xlu0 %433
    %v435 = vadd.f32 %v418, %v419
    %436 = vadd.xlane.f32.xlu0 %v435
    %v437 = vpop.xlane.xlu0 %436
    %v438 = vadd.f32 %v420, %v421
    %439 = vadd.xlane.f32.xlu0 %v438
    %v440 = vpop.xlane.xlu0 %439
    %v441 = vadd.f32 %v422, %v423
    %442 = vadd.xlane.f32.xlu0 %v441
    %v443 = vpop.xlane.xlu0 %442
    %v444 = vadd.f32 %v424, %v425
    %445 = vadd.xlane.f32.xlu0 %v444
    %v446 = vpop.xlane.xlu0 %445
    %v447 = vadd.f32 %v426, %v427
    %448 = vadd.xlane.f32.xlu0 %v447
    %v449 = vpop.xlane.xlu0 %448
    %v450 = vadd.f32 %v428, %v429
    %451 = vadd.xlane.f32.xlu0 %v450
    %v452 = vpop.xlane.xlu0 %451
    %v453 = vadd.f32 %v430, %v431
    %454 = vadd.xlane.f32.xlu0 %v453
    %v455 = vpop.xlane.xlu0 %454
    %v456 = vmul.f32 %v434, 0.00390625
    %v457 = vmul.f32 %v437, 0.00390625
    %v458 = vmul.f32 %v440, 0.00390625
    %v459 = vmul.f32 %v443, 0.00390625
    %v460 = vmul.f32 %v446, 0.00390625
    %v461 = vmul.f32 %v449, 0.00390625
    %v462 = vmul.f32 %v452, 0.00390625
    %v463 = vmul.f32 %v455, 0.00390625
    %464 = vmatprep.subr.mxu0 0.0
    %465 = vmatpush1.msra.mxu0 %v456
    %466 = vmatprep.subr.mxu0 0.0
    %467 = vmatpush1.msra.mxu0 %v457
    %468 = vmatprep.subr.mxu0 0.0
    %469 = vmatpush1.msra.mxu0 %v458
    %470 = vmatprep.subr.mxu0 0.0
    %471 = vmatpush1.msra.mxu0 %v459
    %472 = vmatprep.subr.mxu0 0.0
    %473 = vmatpush1.msra.mxu0 %v460
    %474 = vmatprep.subr.mxu0 0.0
    %475 = vmatpush1.msra.mxu0 %v461
    %476 = vmatprep.subr.mxu0 0.0
    %477 = vmatpush1.msra.mxu0 %v462
    %478 = vmatprep.subr.mxu0 0.0
    %479 = vmatpush1.msra.mxu0 %v463
    %480 = vmatprep.subr.mxu0 0.0
    %481 = vmatpush1.msra.mxu0 0.0
    %482 = vmatprep.subr.mxu0 0.0
    %483 = vmatpush1.msra.mxu0 0.0
    %484 = vmatprep.subr.mxu0 0.0
    %485 = vmatpush1.msra.mxu0 0.0
    %486 = vmatprep.subr.mxu0 0.0
    %487 = vmatpush1.msra.mxu0 0.0
    %488 = vmatprep.subr.mxu0 0.0
    %489 = vmatpush1.msra.mxu0 0.0
    %490 = vmatprep.subr.mxu0 0.0
    %491 = vmatpush1.msra.mxu0 0.0
    %492 = vmatprep.subr.mxu0 0.0
    %493 = vmatpush1.msra.mxu0 0.0
    %494 = vmatprep.subr.mxu0 0.0
    %495 = vmatpush1.msra.mxu0 0.0
    %496 = vmatprep.subr.mxu0 0.0
    %497 = vmatpush1.msra.mxu0 0.0
    %498 = vmatprep.subr.mxu0 0.0
    %499 = vmatpush1.msra.mxu0 0.0
    %500 = vmatprep.subr.mxu0 0.0
    %501 = vmatpush1.msra.mxu0 0.0
    %502 = vmatprep.subr.mxu0 0.0
    %503 = vmatpush1.msra.mxu0 0.0
    %504 = vmatprep.subr.mxu0 0.0
    %505 = vmatpush1.msra.mxu0 0.0
    %506 = vmatprep.subr.mxu0 0.0
    %507 = vmatpush1.msra.mxu0 0.0
    %508 = vmatprep.subr.mxu0 0.0
    %509 = vmatpush1.msra.mxu0 0.0
    %510 = vmatprep.subr.mxu0 0.0
    %511 = vmatpush1.msra.mxu0 0.0
    %512 = vmatprep.subr.mxu0 0.0
    %513 = vmatpush1.msra.mxu0 0.0
    %514 = vmatprep.subr.mxu0 0.0
    %515 = vmatpush1.msra.mxu0 0.0
    %516 = vmatprep.subr.mxu0 0.0
    %517 = vmatpush1.msra.mxu0 0.0
    %518 = vmatprep.subr.mxu0 0.0
    %519 = vmatpush1.msra.mxu0 0.0
    %520 = vmatprep.subr.mxu0 0.0
    %521 = vmatpush1.msra.mxu0 0.0
    %522 = vmatprep.subr.mxu0 0.0
    %523 = vmatpush1.msra.mxu0 0.0
    %524 = vmatprep.subr.mxu0 0.0
    %525 = vmatpush1.msra.mxu0 0.0
    %526 = vmatprep.subr.mxu0 0.0
    %527 = vmatpush1.msra.mxu0 0.0
    %528 = vmatprep.mubr.f32.mxu0 0.0
    %529 = vmatmul.mubr.f32.gmra.mrb[0].mxu0 %v88
    %v530 = vpop.f32.mrb[0].mxu0
    %v531 = vadd.f32 0.0, %v530
    %v532 = vpop.f32.mrb[0].mxu0
    %533 = vdwg.mxu0
    %v534 = vmax.f32 %v531, 0.0
    %v536 = vsel %vm186, %v534, 0
    %538 = vmatprep.subr.mxu0 0.0
    %539 = vmatpush1.msra.mxu0 %v536
    %540 = vmatprep.subr.mxu0 0.0
    %541 = vmatpush1.msra.mxu0 0.0
    %542 = vmatprep.subr.mxu0 0.0
    %543 = vmatpush1.msra.mxu0 0.0
    %544 = vmatprep.subr.mxu0 0.0
    %545 = vmatpush1.msra.mxu0 0.0
    %546 = vmatprep.subr.mxu0 0.0
    %547 = vmatpush1.msra.mxu0 0.0
    %548 = vmatprep.subr.mxu0 0.0
    %549 = vmatpush1.msra.mxu0 0.0
    %550 = vmatprep.subr.mxu0 0.0
    %551 = vmatpush1.msra.mxu0 0.0
    %552 = vmatprep.subr.mxu0 0.0
    %553 = vmatpush1.msra.mxu0 0.0
    %554 = vmatprep.subr.mxu0 0.0
    %555 = vmatpush1.msra.mxu0 0.0
    %556 = vmatprep.subr.mxu0 0.0
    %557 = vmatpush1.msra.mxu0 0.0
    %558 = vmatprep.subr.mxu0 0.0
    %559 = vmatpush1.msra.mxu0 0.0
    %560 = vmatprep.subr.mxu0 0.0
    %561 = vmatpush1.msra.mxu0 0.0
    %562 = vmatprep.subr.mxu0 0.0
    %563 = vmatpush1.msra.mxu0 0.0
    %564 = vmatprep.subr.mxu0 0.0
    %565 = vmatpush1.msra.mxu0 0.0
    %566 = vmatprep.subr.mxu0 0.0
    %567 = vmatpush1.msra.mxu0 0.0
    %568 = vmatprep.subr.mxu0 0.0
    %569 = vmatpush1.msra.mxu0 0.0
    %570 = vmatprep.subr.mxu0 0.0
    %571 = vmatpush1.msra.mxu0 0.0
    %572 = vmatprep.subr.mxu0 0.0
    %573 = vmatpush1.msra.mxu0 0.0
    %574 = vmatprep.subr.mxu0 0.0
    %575 = vmatpush1.msra.mxu0 0.0
    %576 = vmatprep.subr.mxu0 0.0
    %577 = vmatpush1.msra.mxu0 0.0
    %578 = vmatprep.subr.mxu0 0.0
    %579 = vmatpush1.msra.mxu0 0.0
    %580 = vmatprep.subr.mxu0 0.0
    %581 = vmatpush1.msra.mxu0 0.0
    %582 = vmatprep.subr.mxu0 0.0
    %583 = vmatpush1.msra.mxu0 0.0
    %584 = vmatprep.subr.mxu0 0.0
    %585 = vmatpush1.msra.mxu0 0.0
    %586 = vmatprep.subr.mxu0 0.0
    %587 = vmatpush1.msra.mxu0 0.0
    %588 = vmatprep.subr.mxu0 0.0
    %589 = vmatpush1.msra.mxu0 0.0
    %590 = vmatprep.subr.mxu0 0.0
    %591 = vmatpush1.msra.mxu0 0.0
    %592 = vmatprep.subr.mxu0 0.0
    %593 = vmatpush1.msra.mxu0 0.0
    %594 = vmatprep.subr.mxu0 0.0
    %595 = vmatpush1.msra.mxu0 0.0
    %596 = vmatprep.subr.mxu0 0.0
    %597 = vmatpush1.msra.mxu0 0.0
    %598 = vmatprep.subr.mxu0 0.0
    %599 = vmatpush1.msra.mxu0 0.0
    %600 = vmatprep.subr.mxu0 0.0
    %601 = vmatpush1.msra.mxu0 0.0
    %602 = vmatprep.mubr.f32.mxu0 0.0
    %603 = vmatmul.mubr.f32.gmra.mrb[0].mxu0 %v163
    %v604 = vpop.f32.mrb[0].mxu0
    %v605 = vadd.f32 0.0, %v604
    %v606 = vpop.f32.mrb[0].mxu0
    %607 = vmatprep.mubr.f32.mxu0 0.0
    %608 = vmatmul.mubr.f32.gmra.mrb[0].mxu0 %v166
    %v609 = vpop.f32.mrb[0].mxu0
    %v610 = vadd.f32 0.0, %v609
    %v611 = vpop.f32.mrb[0].mxu0
    %612 = vmatprep.mubr.f32.mxu0 0.0
    %613 = vmatmul.mubr.f32.gmra.mrb[0].mxu0 %v169
    %v614 = vpop.f32.mrb[0].mxu0
    %v615 = vadd.f32 0.0, %v614
    %v616 = vpop.f32.mrb[0].mxu0
    %617 = vmatprep.mubr.f32.mxu0 0.0
    %618 = vmatmul.mubr.f32.gmra.mrb[0].mxu0 %v172
    %v619 = vpop.f32.mrb[0].mxu0
    %v620 = vadd.f32 0.0, %v619
    %v621 = vpop.f32.mrb[0].mxu0
    %622 = vmatprep.mubr.f32.mxu0 0.0
    %623 = vmatmul.mubr.f32.gmra.mrb[0].mxu0 %v175
    %v624 = vpop.f32.mrb[0].mxu0
    %v625 = vadd.f32 0.0, %v624
    %v626 = vpop.f32.mrb[0].mxu0
    %627 = vmatprep.mubr.f32.mxu0 0.0
    %628 = vmatmul.mubr.f32.gmra.mrb[0].mxu0 %v178
    %v629 = vpop.f32.mrb[0].mxu0
    %v630 = vadd.f32 0.0, %v629
    %v631 = vpop.f32.mrb[0].mxu0
    %632 = vmatprep.mubr.f32.mxu0 0.0
    %633 = vmatmul.mubr.f32.gmra.mrb[0].mxu0 %v181
    %v634 = vpop.f32.mrb[0].mxu0
    %v635 = vadd.f32 0.0, %v634
    %v636 = vpop.f32.mrb[0].mxu0
    %637 = vmatprep.mubr.f32.mxu0 0.0
    %638 = vmatmul.mubr.f32.gmra.mrb[0].mxu0 %v184
    %v639 = vpop.f32.mrb[0].mxu0
    %v640 = vadd.f32 0.0, %v639
    %v641 = vpop.f32.mrb[0].mxu0
    %642 = vdwg.mxu0
    %v643 = vxor.u32 %v605, 2147483648
    %v644 = vxor.u32 %v610, 2147483648
    %v645 = vxor.u32 %v615, 2147483648
    %v646 = vxor.u32 %v620, 2147483648
    %v647 = vxor.u32 %v625, 2147483648
    %v648 = vxor.u32 %v630, 2147483648
    %v649 = vxor.u32 %v635, 2147483648
    %v650 = vxor.u32 %v640, 2147483648
    %v651 = vmul.f32 %v643, 1.442695
    %v652 = vpow.pop %v651
    %v653 = vmul.f32 %v644, 1.442695
    %v654 = vpow.pop %v653
    %v655 = vmul.f32 %v645, 1.442695
    %v656 = vpow.pop %v655
    %v657 = vmul.f32 %v646, 1.442695
    %v658 = vpow.pop %v657
    %v659 = vmul.f32 %v647, 1.442695
    %v660 = vpow.pop %v659
    %v661 = vmul.f32 %v648, 1.442695
    %v662 = vpow.pop %v661
    %v663 = vmul.f32 %v649, 1.442695
    %v664 = vpow.pop %v663
    %v665 = vmul.f32 %v650, 1.442695
    %v666 = vpow.pop %v665
    %v667 = vadd.f32 %v652, 1.0
    %v668 = vadd.f32 %v654, 1.0
    %v669 = vadd.f32 %v656, 1.0
    %v670 = vadd.f32 %v658, 1.0
    %v671 = vadd.f32 %v660, 1.0
    %v672 = vadd.f32 %v662, 1.0
    %v673 = vadd.f32 %v664, 1.0
    %v674 = vadd.f32 %v666, 1.0
    %v675 = vrcp.pop %v667
    %v676 = vmul.f32 1.0, %v675
    %v677 = vrcp.pop %v668
    %v678 = vmul.f32 1.0, %v677
    %v679 = vrcp.pop %v669
    %v680 = vmul.f32 1.0, %v679
    %v681 = vrcp.pop %v670
    %v682 = vmul.f32 1.0, %v681
    %v683 = vrcp.pop %v671
    %v684 = vmul.f32 1.0, %v683
    %v685 = vrcp.pop %v672
    %v686 = vmul.f32 1.0, %v685
    %v687 = vrcp.pop %v673
    %v688 = vmul.f32 1.0, %v687
    %v689 = vrcp.pop %v674
    %v690 = vmul.f32 1.0, %v689
    %692 = vset.pattern.permute.xlu0 0
    %693 = vperm.xlu0 %692, %v676
    %v694 = vpop.permute.xlu0 %693
    %697 = vset.pattern.permute.xlu0 0
    %698 = vperm.xlu0 %697, %v678
    %v699 = vpop.permute.xlu0 %698
    %702 = vset.pattern.permute.xlu0 0
    %703 = vperm.xlu0 %702, %v680
    %v704 = vpop.permute.xlu0 %703
    %707 = vset.pattern.permute.xlu0 0
    %708 = vperm.xlu0 %707, %v682
    %v709 = vpop.permute.xlu0 %708
    %712 = vset.pattern.permute.xlu0 0
    %713 = vperm.xlu0 %712, %v684
    %v714 = vpop.permute.xlu0 %713
    %717 = vset.pattern.permute.xlu0 0
    %718 = vperm.xlu0 %717, %v686
    %v719 = vpop.permute.xlu0 %718
    %722 = vset.pattern.permute.xlu0 0
    %723 = vperm.xlu0 %722, %v688
    %v724 = vpop.permute.xlu0 %723
    %727 = vset.pattern.permute.xlu0 0
    %728 = vperm.xlu0 %727, %v690
    %v729 = vpop.permute.xlu0 %728
    %v731 = vmul.f32 %v416, %v694
    %v732 = vmul.f32 %v417, %v694
    %v733 = vmul.f32 %v418, %v699
    %v734 = vmul.f32 %v419, %v699
    %v735 = vmul.f32 %v420, %v704
    %v736 = vmul.f32 %v421, %v704
    %v737 = vmul.f32 %v422, %v709
    %v738 = vmul.f32 %v423, %v709
    %v739 = vmul.f32 %v424, %v714
    %v740 = vmul.f32 %v425, %v714
    %v741 = vmul.f32 %v426, %v719
    %v742 = vmul.f32 %v427, %v719
    %v743 = vmul.f32 %v428, %v724
    %v744 = vmul.f32 %v429, %v724
    %v745 = vmul.f32 %v430, %v729
    %v746 = vmul.f32 %v431, %v729
    %s747 = scalar_lea.vmem [#allocation5], 128
    %748 = vst [vmem:[%s747] sm:$0xff] %v731
    %749 = vst [vmem:[%s747 + $0x8] sm:$0xff] %v732
    %750 = vst [vmem:[%s747 + $0x10] sm:$0xff] %v733
    %751 = vst [vmem:[%s747 + $0x18] sm:$0xff] %v734
    %752 = vst [vmem:[%s747 + $0x20] sm:$0xff] %v735
    %753 = vst [vmem:[%s747 + $0x28] sm:$0xff] %v736
    %754 = vst [vmem:[%s747 + $0x30] sm:$0xff] %v737
    %755 = vst [vmem:[%s747 + $0x38] sm:$0xff] %v738
    %756 = vst [vmem:[%s747 + $0x40] sm:$0xff] %v739
    %757 = vst [vmem:[%s747 + $0x48] sm:$0xff] %v740
    %758 = vst [vmem:[%s747 + $0x50] sm:$0xff] %v741
    %759 = vst [vmem:[%s747 + $0x58] sm:$0xff] %v742
    %760 = vst [vmem:[%s747 + $0x60] sm:$0xff] %v743
    %761 = vst [vmem:[%s747 + $0x68] sm:$0xff] %v744
    %762 = vst [vmem:[%s747 + $0x70] sm:$0xff] %v745
    %763 = vst [vmem:[%s747 + $0x78] sm:$0xff] %v746
    // Predicated region
    $region18: #{tpu_custom_call.1} parent=1 // pred_check
      _
    $region19: #{tpu_custom_call.1} parent=1 // pred_check_branch
      %765 = sbr.rel (0) target = $region21
    $region20: #{tpu_custom_call.1} parent=1 // pred_region
      %s767 = ssub.s32 4096, 4096
      %768 = vsyncadd [#allocation4], %s767
      %s769 = sshll.u32 [#allocation5], 4
      %s770 = int_to_ptr.vmem [resolvable:$true] %s769
      %775 = dma.vmem_to_hbm [thread:$0]  %s770, 4096, %s3, [#allocation4], 256, 256, 16
    $region21: #{tpu_custom_call.1} parent=1 // pred_fallthru
      _
    // Predicated region
    $region22: #{tpu_custom_call.1} parent=1 // pred_check
      _
    $region23: #{tpu_custom_call.1} parent=1 // pred_check_branch
      %777 = sbr.rel (0) target = $region25
    $region24: #{tpu_custom_call.1} parent=1 // pred_region
      %778 = dma.done [#allocation4], 4096
    $region25: #{tpu_custom_call.1} parent=1 // pred_fallthru
      _
    %779 = vsyncpa [#allocation3], 1
    %780 = vsyncpa [#allocation4], 1

</llo_original>
